<compile_context>
chip_gen: v7x
topology: tpu7x:2x2x1
jax: 0.10.0
libtpu: 0.0.40
codegen_flags: <defaults>
</compile_context>

<pallas_src>
import functools

import jax
import jax.numpy as jnp
from jax.experimental import pallas as pl
from jax.experimental.pallas import tpu as pltpu


def _round_up(x, m):
    return ((x + m - 1) // m) * m


def _combined_loss_kernel(pred_ref, true_ref, centers_ref, out_ref, *,
                          batch, compute_ce, compute_dist):
    i = pl.program_id(0)

    pred = pred_ref[...]                      # (TB, C), caller dtype (f32 or bf16)
    labels = true_ref[...]                    # (TB, 1) int32
    TB, C = pred.shape

    iota_c = jax.lax.broadcasted_iota(jnp.int32, (TB, C), 1)
    row_ids = i * TB + jax.lax.broadcasted_iota(jnp.int32, (TB, 1), 0)
    valid = row_ids < batch                   # masks the ragged last block (no pad copy)

    true_mask = iota_c == labels              # (TB, C) bool

    # Row max in the native dtype (max / compare are exact); shared by CE and argmax.
    m = jnp.max(pred, axis=1, keepdims=True)  # (TB, 1)

    if compute_ce:
        pred_f32 = pred.astype(jnp.float32)   # upcast only the exp/logsumexp path
        m_f32 = m.astype(jnp.float32)
        lse = m_f32 + jnp.log(jnp.sum(jnp.exp(pred_f32 - m_f32), axis=1, keepdims=True))
        target_logit = jnp.sum(jnp.where(true_mask, pred_f32, 0.0),
                               axis=1, keepdims=True)                  # (TB, 1)
        ce_rows = jnp.where(valid, lse - target_logit, 0.0)
        out_ref[0, 0] = jnp.sum(ce_rows)
    else:
        out_ref[0, 0] = jnp.float32(0.0)

    if compute_dist:
        # First-occurrence argmax along classes (masked min over indices), native dtype.
        is_max = pred == m
        am = jnp.min(jnp.where(is_max, iota_c, C), axis=1, keepdims=True)  # (TB, 1)
        am_mask = iota_c == am
        # Center lookup on the (otherwise idle) MXU:
        #   (am_mask - true_mask) @ centersT, where centersT is (C, 128) with
        #   column 0 = x coords, column 1 = y coords (rest zero).
        diff = am_mask.astype(jnp.float32) - true_mask.astype(jnp.float32)  # (TB, C)
        dxy = jnp.dot(diff, centers_ref[...], preferred_element_type=jnp.float32)
        dx = dxy[:, 0:1]
        dy = dxy[:, 1:2]
        d = jnp.sqrt(dx * dx + dy * dy)                                     # (TB, 1)
        d = jnp.where(valid, d, 0.0)
        out_ref[0, 1] = jnp.sum(d)
    else:
        out_ref[0, 1] = jnp.float32(0.0)


def combined_loss(pred, true, centers, dist_weight=1.0, *, block_rows=None):
    """pred: (B, C) float (f32 or bf16), true: (B,) int, centers: (2, C) float."""
    B, C = pred.shape
    itemsize = jnp.dtype(pred.dtype).itemsize
    sub = 16 if itemsize == 2 else 8              # sublane packing granularity

    # --- tile sizing by VMEM bytes, not a fixed row cap -------------------------------
    # Per-row VMEM cost across the pipeline:
    #   pred   : 2 buffers x lane-padded C x itemsize
    #   labels : 2 buffers x 128 lanes x 4 B       ((TB,1) int32 block lane-pads to 128)
    #   temps  : ~6 live tile-sized f32 values at peak inside the kernel
    C_lanes = _round_up(C, 128)
    per_row = 2 * C_lanes * itemsize + 2 * 128 * 4 + 6 * C_lanes * 4
    vmem_budget = 16 * 1024 * 1024                # keeps total well under v7x scoped VMEM
    TB_budget = max(sub, (vmem_budget // per_row) // sub * sub)
    if block_rows is not None:
        TB_budget = max(sub, _round_up(block_rows, sub))
    if B <= TB_budget:
        TB = B                                    # single block; block == full dim is always legal
    else:
        TB = TB_budget                            # multi-block; ragged last block masked in-kernel
    nblk = pl.cdiv(B, TB)

    # NOTE: no jnp.pad of pred/true -- the ragged last block is masked via `valid`.
    true2 = true.reshape(B, 1).astype(jnp.int32)

    # (C, 128) centers matrix for the MXU lookup: col 0 = x coords, col 1 = y coords.
    centers = centers.astype(jnp.float32)
    centersT = jnp.zeros((C, 128), jnp.float32)
    centersT = centersT.at[:, 0].set(centers[0]).at[:, 1].set(centers[1])

    # Trace-time specialization only when dist_weight is a concrete number.
    try:
        w_static = float(dist_weight)
    except Exception:
        w_static = None
    compute_ce = (w_static is None) or (w_static != 1.0)
    compute_dist = (w_static is None) or (w_static != 0.0)

    kernel = functools.partial(_combined_loss_kernel, batch=B,
                               compute_ce=compute_ce, compute_dist=compute_dist)

    partials = pl.pallas_call(
        kernel,
        out_shape=jax.ShapeDtypeStruct((nblk, 2), jnp.float32),
        grid=(nblk,),
        in_specs=[
            pl.BlockSpec((TB, C), lambda i: (i, 0)),       # pred tile        (VMEM)
            pl.BlockSpec((TB, 1), lambda i: (i, 0)),       # labels tile      (VMEM)
            pl.BlockSpec((C, 128), lambda i: (0, 0)),      # centers, resident across grid
        ],
        out_specs=pl.BlockSpec((1, 2), lambda i: (i, 0),
                               memory_space=pltpu.MemorySpace.SMEM),
        compiler_params=pltpu.CompilerParams(
            dimension_semantics=("parallel",),             # per-block partials -> both v7x TCs
            vmem_limit_bytes=32 * 1024 * 1024),
    )(pred, true2, centersT)

    # Final reduction + weighted combine in f32 by XLA (tiny: (nblk, 2) array).
    ce_sum = jnp.sum(partials[:, 0])
    dist_sum = jnp.sum(partials[:, 1])
    w = dist_weight
    return w * (dist_sum * (1.0 / 255.0)) + (1.0 - w) * (ce_sum / B)


def reference_combined_loss(pred, true, centers, dist_weight=1.0):
    pred = pred.astype(jnp.float32)
    B = pred.shape[0]
    lse = jax.scipy.special.logsumexp(pred, axis=1)
    ce = jnp.mean(lse - pred[jnp.arange(B), true])
    am = jnp.argmax(pred, axis=1)
    cx, cy = centers[0], centers[1]
    d = jnp.sqrt((cx[am] - cx[true]) ** 2 + (cy[am] - cy[true]) ** 2) / 255.0
    dist = jnp.sum(d)
    return dist_weight * dist + (1.0 - dist_weight) * ce


if __name__ == "__main__":
    C = 16

    key = jax.random.PRNGKey(0)
    k_p1, k_t1, k_cent, k_p2, k_t2 = jax.random.split(key, 5)

    B1 = 13   # non-multiple of 8 to exercise the block == full-dim path
    pred1 = jax.random.normal(k_p1, (B1, C), dtype=jnp.float32)
    true1 = jax.random.randint(k_t1, (B1,), 0, C, dtype=jnp.int32)

    B2 = 300  # multi-block + ragged last block + parallel partial sums
    pred2 = jax.random.normal(k_p2, (B2, C), dtype=jnp.float32)
    true2 = jax.random.randint(k_t2, (B2,), 0, C, dtype=jnp.int32)

    # Deterministic synthetic class centers (stand-in for ClassificationDataset.get_centers()),
    # coordinates in [0, 255] like pixel centers.
    centers = jax.random.uniform(k_cent, (2, C), dtype=jnp.float32) * 255.0

    cases = [
        (pred1, true1, 1.0, None),                      # module default: CE path specialized away
        (pred1, true1, 0.3, None),                      # both paths, single block
        (pred1.astype(jnp.bfloat16), true1, 0.3, None),  # bf16 input, native-dtype distance path
        (pred2, true2, 0.3, 64),                        # multi-block, ragged last block
        (pred2, true2, 1.0, 64),                        # distance-only, multi-block
    ]

    for p, t, w, blk in cases:
        out = combined_loss(p, t, centers, w, block_rows=blk)
        out = jax.block_until_ready(out)
        ref = reference_combined_loss(p, t, centers, w)
        assert jnp.allclose(out, ref, rtol=1e-4, atol=1e-4), (w, blk, out, ref)

    print("KERNEL_OK")
</pallas_src>

<mosaic_0001>
module attributes {stable_mosaic.version = 11 : i64} {
  func.func @_combined_loss_kernel(%arg0: i32, %arg1: memref<13x16xf32, #tpu.memory_space<vmem>>, %arg2: memref<13x1xi32, #tpu.memory_space<vmem>>, %arg3: memref<16x128xf32, #tpu.memory_space<vmem>>, %arg4: memref<1x2xf32, #tpu.memory_space<smem>>) attributes {dimension_semantics = [#tpu.dimension_semantics<parallel>], iteration_bounds = array<i64: 1>, scalar_prefetch = 0 : i64, scratch_operands = 0 : i64, tpu.core_type = #tpu.core_type<tc>, window_params = [{transform_indices = @transform_0, window_bounds = array<i64: 13, 16>}, {transform_indices = @transform_1, window_bounds = array<i64: 13, 1>}, {pipeline_mode = #tpu.pipeline_mode<synchronous>, transform_indices = @transform_2, window_bounds = array<i64: 16, 128>}, {transform_indices = @transform_3, window_bounds = array<i64: 1, 2>}]} {
    %c0 = arith.constant 0 : index
    %c0_0 = arith.constant 0 : index
    %0 = vector.load %arg1[%c0, %c0_0] : memref<13x16xf32, #tpu.memory_space<vmem>>, vector<13x16xf32>
    %c0_1 = arith.constant 0 : index
    %c0_2 = arith.constant 0 : index
    %1 = vector.load %arg2[%c0_1, %c0_2] : memref<13x1xi32, #tpu.memory_space<vmem>>, vector<13x1xi32>
    %2 = tpu.iota {dimensions = array<i32: 1>} : vector<13x16xi32>
    %c13_i32 = arith.constant 13 : i32
    %3 = arith.muli %arg0, %c13_i32 : i32
    %4 = tpu.iota {dimensions = array<i32: 0>} : vector<13x1xi32>
    %5 = vector.broadcast %3 : i32 to vector<13x1xi32>
    %6 = arith.addi %5, %4 : vector<13x1xi32>
    %c13_i32_3 = arith.constant 13 : i32
    %7 = vector.broadcast %c13_i32_3 : i32 to vector<13x1xi32>
    %8 = arith.cmpi slt, %6, %7 : vector<13x1xi32>
    %9 = vector.broadcast %1 : vector<13x1xi32> to vector<13x16xi32>
    %10 = arith.cmpi eq, %2, %9 : vector<13x16xi32>
    %cst = arith.constant dense<0xFF800000> : vector<13xf32>
    %11 = vector.multi_reduction <maximumf>, %0, %cst [1] : vector<13x16xf32> to vector<13xf32>
    %12 = vector.shape_cast %11 : vector<13xf32> to vector<13x1xf32>
    %cst_4 = arith.constant 0.000000e+00 : f32
    %c0_5 = arith.constant 0 : index
    %c0_6 = arith.constant 0 : index
    %13 = memref.load %arg4[%c0_5, %c0_6] : memref<1x2xf32, #tpu.memory_space<smem>>
    memref.store %cst_4, %arg4[%c0_5, %c0_6] : memref<1x2xf32, #tpu.memory_space<smem>>
    %14 = vector.broadcast %12 : vector<13x1xf32> to vector<13x16xf32>
    %15 = arith.cmpf oeq, %0, %14 : vector<13x16xf32>
    %c16_i32 = arith.constant 16 : i32
    %16 = vector.broadcast %c16_i32 : i32 to vector<13x16xi32>
    %17 = arith.select %15, %2, %16 : vector<13x16xi1>, vector<13x16xi32>
    %cst_7 = arith.constant dense<2147483647> : vector<13xi32>
    %18 = vector.multi_reduction <minsi>, %17, %cst_7 [1] : vector<13x16xi32> to vector<13xi32>
    %19 = vector.shape_cast %18 : vector<13xi32> to vector<13x1xi32>
    %20 = vector.broadcast %19 : vector<13x1xi32> to vector<13x16xi32>
    %21 = arith.cmpi eq, %2, %20 : vector<13x16xi32>
    %22 = arith.extui %21 : vector<13x16xi1> to vector<13x16xi32>
    %23 = arith.sitofp %22 : vector<13x16xi32> to vector<13x16xf32>
    %24 = arith.extui %10 : vector<13x16xi1> to vector<13x16xi32>
    %25 = arith.sitofp %24 : vector<13x16xi32> to vector<13x16xf32>
    %26 = arith.subf %23, %25 : vector<13x16xf32>
    %c0_8 = arith.constant 0 : index
    %c0_9 = arith.constant 0 : index
    %27 = vector.load %arg3[%c0_8, %c0_9] : memref<16x128xf32, #tpu.memory_space<vmem>>, vector<16x128xf32>
    %cst_10 = arith.constant dense<0.000000e+00> : vector<13x128xf32>
    %28 = tpu.matmul %26, %27, %cst_10 {dimension_numbers = #tpu.dot_dimension_numbers<[1], [0], [0], [1], [0, 0, 1, 1], [], []>} : vector<13x16xf32>, vector<16x128xf32>, vector<13x128xf32> -> vector<13x128xf32>
    %29 = vector.extract_strided_slice %28 {offsets = [0, 0], sizes = [13, 1], strides = [1, 1]} : vector<13x128xf32> to vector<13x1xf32>
    %30 = vector.extract_strided_slice %28 {offsets = [0, 1], sizes = [13, 1], strides = [1, 1]} : vector<13x128xf32> to vector<13x1xf32>
    %31 = arith.mulf %29, %29 : vector<13x1xf32>
    %32 = arith.mulf %30, %30 : vector<13x1xf32>
    %33 = arith.addf %31, %32 : vector<13x1xf32>
    %34 = math.sqrt %33 : vector<13x1xf32>
    %cst_11 = arith.constant 0.000000e+00 : f32
    %35 = vector.broadcast %cst_11 : f32 to vector<13x1xf32>
    %36 = arith.select %8, %34, %35 : vector<13x1xi1>, vector<13x1xf32>
    %37 = vector.shape_cast %36 : vector<13x1xf32> to vector<1x13x1xf32>
    %cst_12 = arith.constant dense<0.000000e+00> : vector<1xf32>
    %38 = vector.multi_reduction <add>, %37, %cst_12 [1, 2] : vector<1x13x1xf32> to vector<1xf32>
    %39 = vector.shape_cast %38 : vector<1xf32> to vector<1x1x1xf32>
    %40 = vector.extract %39[0, 0, 0] : f32 from vector<1x1x1xf32>
    %c0_13 = arith.constant 0 : index
    %c1 = arith.constant 1 : index
    %41 = memref.load %arg4[%c0_13, %c1] : memref<1x2xf32, #tpu.memory_space<smem>>
    memref.store %40, %arg4[%c0_13, %c1] : memref<1x2xf32, #tpu.memory_space<smem>>
    return
  }
  func.func @transform_0(%arg0: i32) -> (i32, i32) {
    %c0_i32 = arith.constant 0 : i32
    %c0_i32_0 = arith.constant 0 : i32
    return %arg0, %c0_i32 : i32, i32
  }
  func.func @transform_1(%arg0: i32) -> (i32, i32) {
    %c0_i32 = arith.constant 0 : i32
    %c0_i32_0 = arith.constant 0 : i32
    return %arg0, %c0_i32 : i32, i32
  }
  func.func @transform_2(%arg0: i32) -> (i32, i32) {
    %c0_i32 = arith.constant 0 : i32
    %c0_i32_0 = arith.constant 0 : i32
    %c0_i32_1 = arith.constant 0 : i32
    return %c0_i32, %c0_i32_0 : i32, i32
  }
  func.func @transform_3(%arg0: i32) -> (i32, i32) {
    %c0_i32 = arith.constant 0 : i32
    %c0_i32_0 = arith.constant 0 : i32
    return %arg0, %c0_i32 : i32, i32
  }
}

</mosaic_0001>

<llo_original>
// kernel: tpu_custom_call.1
$region0: #{tpu_custom_call.1}
  #allocation0 [shape = 'u32[]', space=smem, size = 0x4, offset = 0x4, fixed_abs, tag = 'smem constant byte address 0x4 - core index']
  #allocation1 [shape = 'u32[144,128]{1,0:T(1,128)}', space=vmem, size = 0x12000, scoped, tag = 'internal scratch']
  %s0 = inlined_call_operand.vmem [shape: f32[13,16], index: 0, kind: input, shape index: {}]
  %s1 = inlined_call_operand.vmem [shape: s32[13,1], index: 1, kind: input, shape index: {}]
  %s2 = inlined_call_operand.hbm [shape: f32[16,128], index: 2, kind: input, shape index: {}]
  %s3 = inlined_call_operand.hbm [shape: f32[1,2], index: 3, kind: output, shape index: {}]
  %s4 = sld [smem:[#allocation0]]
  $region26: #{tpu_custom_call.1} parent=0
    _
  %s6 = ssub.s32 1, %s4
  %s7 = scalar_select 0, %s6, %s4
  $region1: #{tpu_custom_call.1} parent=0
    #allocation2 [shape = 'u8[8192]{0}', space=vmem, size = 0x2000, scoped, tag = 'input window, operand 2, single buffered']
    #allocation3 [shape = 's32[1]{0}', space=sflag, size = 0x4, scoped, tag = 'scoped memory for tpu_custom_call.1']
    #allocation4 [shape = 's32[1]{0}', space=sflag, size = 0x4, scoped, tag = 'scoped memory for tpu_custom_call.1']
    #allocation5 [shape = 'u8[512]{0}', space=smem, size = 0x200, scoped, tag = 'output window, operand 0, single buffered']
    %8 = vsyncpa [#allocation3], 0
    %9 = vsyncpa [#allocation4], 0
    // Predicated region
    $region2: #{tpu_custom_call.1} parent=1 // pred_check
      _
    $region3: #{tpu_custom_call.1} parent=1 // pred_check_branch
      %11 = sbr.rel (0) target = $region5
    $region4: #{tpu_custom_call.1} parent=1 // pred_region
      _
    $region5: #{tpu_custom_call.1} parent=1 // pred_fallthru
      _
    // Predicated region
    $region6: #{tpu_custom_call.1} parent=1 // pred_check
      _
    $region7: #{tpu_custom_call.1} parent=1 // pred_check_branch
      %13 = sbr.rel (0) target = $region9
    $region8: #{tpu_custom_call.1} parent=1 // pred_region
      _
    $region9: #{tpu_custom_call.1} parent=1 // pred_fallthru
      _
    // Predicated region
    $region10: #{tpu_custom_call.1} parent=1 // pred_check
      _
    $region11: #{tpu_custom_call.1} parent=1 // pred_check_branch
      %15 = sbr.rel (0) target = $region13
    $region12: #{tpu_custom_call.1} parent=1 // pred_region
      %s17 = ssub.s32 256, 256
      %18 = vsyncadd [#allocation3], %s17
      %s19 = sshll.u32 [#allocation2], 4
      %s20 = int_to_ptr.vmem [resolvable:$true] %s19
      %25 = dma.hbm_to_vmem [thread:$0]  %s2, 256, %s20, [#allocation3], 128, 128, 8
    $region13: #{tpu_custom_call.1} parent=1 // pred_fallthru
      _
    // Predicated region
    $region14: #{tpu_custom_call.1} parent=1 // pred_check
      _
    $region15: #{tpu_custom_call.1} parent=1 // pred_check_branch
      %27 = sbr.rel (0) target = $region17
    $region16: #{tpu_custom_call.1} parent=1 // pred_region
      %28 = dma.done [#allocation3], 256
    $region17: #{tpu_custom_call.1} parent=1 // pred_fallthru
      _
    %v29 = vld [vmem:[%s0] sm:$0xff]
    %v30 = vld [vmem:[%s0 + $0x8] sm:$0x1f]
    %v31 = vld [vmem:[%s1] sm:$0xff]
    %v32 = vld [vmem:[%s1 + $0x8] sm:$0x1f]
    %v33 = vlaneseq
    %v34 = vand.u32 %v33, 127
    %s35 = smul.u32 0, 13
    %v36 = vlaneseq
    %v37 = vshrl.u32 %v36, 7
    %v38 = vadd.s32 %v37, 8
    %v39 = vstv %s35
    %v40 = vadd.s32 %v39, %v37
    %v41 = vadd.s32 %v39, %v38
    %vm42 = vcmp.lt.s32.totalorder %v40, 13
    %vm43 = vcmp.lt.s32.totalorder %v41, 13
    %44 = vset.pattern.permute.xlu0 0
    %45 = vperm.xlu0 %44, %v31
    %v46 = vpop.permute.xlu0 %45
    %47 = vset.pattern.permute.xlu0 0
    %48 = vperm.xlu0 %47, %v32
    %v49 = vpop.permute.xlu0 %48
    %vm50 = vcmp.eq.s32.totalorder %v34, %v46
    %vm51 = vcmp.eq.s32.totalorder %v34, %v49
    %vm52 = vcmask 130048
    %v53 = vsel %vm52, %v29, -inf
    %54 = vmax.xlane.f32.xlu0 %v53
    %v55 = vpop.xlane.xlu0 %54
    %vm56 = vcmask 126976
    %v57 = vsel %vm56, %v30, -inf
    %58 = vmax.xlane.f32.xlu0 %v57
    %v59 = vpop.xlane.xlu0 %58
    %s60 = scalar_lea.smem [#allocation5], 0
    %61 = sst [smem:[%s60]] 0.0
    %vm62 = vcmp.eq.f32.partialorder %v29, %v55
    %vm63 = vcmp.eq.f32.partialorder %v30, %v59
    %v64 = vsel %vm62, %v34, 16
    %v65 = vsel %vm63, %v34, 16
    %v66 = vsel %vm52, %v64, 2147483647
    %v67 = vand.u32 %v66, 65535
    %v68 = vshra.s32 %v66, 16
    %v69 = vcvt.s32.f32 %v67
    %v70 = vcvt.s32.f32 %v68
    %71 = vmin.xlane.f32.xlu0 %v70
    %v72 = vpop.xlane.xlu0 %71
    %vm73 = vcmp.eq.f32.partialorder %v70, %v72
    %v74 = vsel %vm73, %v69, inf
    %75 = vmin.xlane.f32.xlu0 %v74
    %v76 = vpop.xlane.xlu0 %75
    %v77 = vcvt.f32.s32 %v76
    %v78 = vcvt.f32.s32 %v72
    %v79 = vshll.u32 %v78, 16
    %v80 = vadd.s32 %v79, %v77
    %v81 = vsel %vm56, %v65, 2147483647
    %v82 = vand.u32 %v81, 65535
    %v83 = vshra.s32 %v81, 16
    %v84 = vcvt.s32.f32 %v82
    %v85 = vcvt.s32.f32 %v83
    %86 = vmin.xlane.f32.xlu0 %v85
    %v87 = vpop.xlane.xlu0 %86
    %vm88 = vcmp.eq.f32.partialorder %v85, %v87
    %v89 = vsel %vm88, %v84, inf
    %90 = vmin.xlane.f32.xlu0 %v89
    %v91 = vpop.xlane.xlu0 %90
    %v92 = vcvt.f32.s32 %v91
    %v93 = vcvt.f32.s32 %v87
    %v94 = vshll.u32 %v93, 16
    %v95 = vadd.s32 %v94, %v92
    %vm96 = vcmp.eq.s32.totalorder %v34, %v80
    %vm97 = vcmp.eq.s32.totalorder %v34, %v95
    %v98 = vsel %vm96, 1, 0
    %v99 = vsel %vm97, 1, 0
    %v100 = vcvt.s32.f32 %v98
    %v101 = vcvt.s32.f32 %v99
    %v102 = vsel %vm50, 1, 0
    %v103 = vsel %vm51, 1, 0
    %v104 = vcvt.s32.f32 %v102
    %v105 = vcvt.s32.f32 %v103
    %v106 = vsub.f32 %v100, %v104
    %v107 = vsub.f32 %v101, %v105
    %v108 = vld [vmem:[#allocation2] sm:$0xff]
    %v109 = vld [vmem:[#allocation2 + $0x8] sm:$0xff]
    %v111 = vsel %vm52, %v106, 0
    %v114 = vsel %vm52, %v107, 0
    %116 = vmatprep.subr.mxu0 0.0
    %117 = vmatpush1.msra.mxu0 %v108
    %118 = vmatprep.subr.mxu0 0.0
    %119 = vmatpush1.msra.mxu0 %v109
    %120 = vmatprep.subr.mxu0 0.0
    %121 = vmatpush1.msra.mxu0 0.0
    %122 = vmatprep.subr.mxu0 0.0
    %123 = vmatpush1.msra.mxu0 0.0
    %124 = vmatprep.subr.mxu0 0.0
    %125 = vmatpush1.msra.mxu0 0.0
    %126 = vmatprep.subr.mxu0 0.0
    %127 = vmatpush1.msra.mxu0 0.0
    %128 = vmatprep.subr.mxu0 0.0
    %129 = vmatpush1.msra.mxu0 0.0
    %130 = vmatprep.subr.mxu0 0.0
    %131 = vmatpush1.msra.mxu0 0.0
    %132 = vmatprep.subr.mxu0 0.0
    %133 = vmatpush1.msra.mxu0 0.0
    %134 = vmatprep.subr.mxu0 0.0
    %135 = vmatpush1.msra.mxu0 0.0
    %136 = vmatprep.subr.mxu0 0.0
    %137 = vmatpush1.msra.mxu0 0.0
    %138 = vmatprep.subr.mxu0 0.0
    %139 = vmatpush1.msra.mxu0 0.0
    %140 = vmatprep.subr.mxu0 0.0
    %141 = vmatpush1.msra.mxu0 0.0
    %142 = vmatprep.subr.mxu0 0.0
    %143 = vmatpush1.msra.mxu0 0.0
    %144 = vmatprep.subr.mxu0 0.0
    %145 = vmatpush1.msra.mxu0 0.0
    %146 = vmatprep.subr.mxu0 0.0
    %147 = vmatpush1.msra.mxu0 0.0
    %148 = vmatprep.subr.mxu0 0.0
    %149 = vmatpush1.msra.mxu0 0.0
    %150 = vmatprep.subr.mxu0 0.0
    %151 = vmatpush1.msra.mxu0 0.0
    %152 = vmatprep.subr.mxu0 0.0
    %153 = vmatpush1.msra.mxu0 0.0
    %154 = vmatprep.subr.mxu0 0.0
    %155 = vmatpush1.msra.mxu0 0.0
    %156 = vmatprep.subr.mxu0 0.0
    %157 = vmatpush1.msra.mxu0 0.0
    %158 = vmatprep.subr.mxu0 0.0
    %159 = vmatpush1.msra.mxu0 0.0
    %160 = vmatprep.subr.mxu0 0.0
    %161 = vmatpush1.msra.mxu0 0.0
    %162 = vmatprep.subr.mxu0 0.0
    %163 = vmatpush1.msra.mxu0 0.0
    %164 = vmatprep.subr.mxu0 0.0
    %165 = vmatpush1.msra.mxu0 0.0
    %166 = vmatprep.subr.mxu0 0.0
    %167 = vmatpush1.msra.mxu0 0.0
    %168 = vmatprep.subr.mxu0 0.0
    %169 = vmatpush1.msra.mxu0 0.0
    %170 = vmatprep.subr.mxu0 0.0
    %171 = vmatpush1.msra.mxu0 0.0
    %172 = vmatprep.subr.mxu0 0.0
    %173 = vmatpush1.msra.mxu0 0.0
    %174 = vmatprep.subr.mxu0 0.0
    %175 = vmatpush1.msra.mxu0 0.0
    %176 = vmatprep.subr.mxu0 0.0
    %177 = vmatpush1.msra.mxu0 0.0
    %178 = vmatprep.subr.mxu0 0.0
    %179 = vmatpush1.msra.mxu0 0.0
    %180 = vmatprep.mubr.f32.mxu0 0.0
    %181 = vmatmul.mubr.f32.gmra.mrb[0].mxu0 %v111
    %v182 = vpop.f32.mrb[0].mxu0
    %v183 = vadd.f32 0.0, %v182
    %v184 = vpop.f32.mrb[0].mxu0
    %185 = vmatprep.mubr.f32.mxu0 0.0
    %186 = vmatmul.mubr.f32.gmra.mrb[0].mxu0 %v114
    %v187 = vpop.f32.mrb[0].mxu0
    %v188 = vadd.f32 0.0, %v187
    %v189 = vpop.f32.mrb[0].mxu0
    %190 = vdwg.mxu0
    %v191 = vmul.f32 %v183, %v183
    %v192 = vmul.f32 %v188, %v188
    %195 = vrot.lane.b32.xlu0 %v191, 127
    %v196 = vpop.permute.xlu0 %195
    %197 = vrot.lane.b32.xlu0 %v192, 127
    %v198 = vpop.permute.xlu0 %197
    %v201 = vadd.f32 %v191, %v196
    %v202 = vadd.f32 %v192, %v198
    %v203 = vrsqrt.pop %v201
    %v204 = vmul.f32 %v201, %v203
    %vm205 = vcmp.eq.f32.partialorder %v201, inf
    %v206 = vsel %vm205, %v201, %v204
    %vm207 = vcmp.eq.f32.partialorder %v201, 0.0
    %v208 = vand.u32 %v201, 2147483648
    %v209 = vsel %vm207, %v208, %v206
    %v210 = vrsqrt.pop %v202
    %v211 = vmul.f32 %v202, %v210
    %vm212 = vcmp.eq.f32.partialorder %v202, inf
    %v213 = vsel %vm212, %v202, %v211
    %vm214 = vcmp.eq.f32.partialorder %v202, 0.0
    %v215 = vand.u32 %v202, 2147483648
    %v216 = vsel %vm214, %v215, %v213
    %v217 = vsel %vm42, %v209, 0.0
    %v218 = vsel %vm43, %v216, 0.0
    %vm219 = vcmask 7168
    %v220 = vsel %vm219, %v217, 0.0
    %vm221 = vcmask 4096
    %v222 = vsel %vm221, %v218, 0.0
    %v223 = vadd.f32 %v220, %v222
    %224 = vadd.xlane.f32.xlu0 %v223
    %v225 = vpop.xlane.xlu0 %224
    %v226 = vrot.slane %v225, 4
    %v227 = vadd.f32 %v225, %v226
    %v228 = vrot.slane %v227, 2
    %v229 = vadd.f32 %v227, %v228
    %v230 = vrot.slane %v229, 1
    %v231 = vadd.f32 %v229, %v230
    %s232 = vtos %v231
    %s233 = scalar_lea.smem [#allocation5], 1
    %234 = sst [smem:[%s233]] %s232
    // Predicated region
    $region18: #{tpu_custom_call.1} parent=1 // pred_check
      _
    $region19: #{tpu_custom_call.1} parent=1 // pred_check_branch
      %236 = sbr.rel (0) target = $region21
    $region20: #{tpu_custom_call.1} parent=1 // pred_region
      %s238 = ssub.s32 16, 16
      %239 = vsyncadd [#allocation4], %s238
      %242 = dma.smem_to_hbm [#allocation5], 16, %s3, [#allocation4]
    $region21: #{tpu_custom_call.1} parent=1 // pred_fallthru
      _
    // Predicated region
    $region22: #{tpu_custom_call.1} parent=1 // pred_check
      _
    $region23: #{tpu_custom_call.1} parent=1 // pred_check_branch
      %244 = sbr.rel (0) target = $region25
    $region24: #{tpu_custom_call.1} parent=1 // pred_region
      %245 = dma.done [#allocation4], 16
    $region25: #{tpu_custom_call.1} parent=1 // pred_fallthru
      _
    %246 = sfence
    %247 = vsyncpa [#allocation3], 1
    %248 = vsyncpa [#allocation4], 1

</llo_original>
